<compile_context>
chip_gen: v5e
topology: v5e:2x2
jax: 0.10.0
libtpu: 0.0.40
codegen_flags: <defaults>
</compile_context>

<pallas_src>
import functools
import numpy as np
import jax
import jax.numpy as jnp
from jax import lax
from jax.experimental import pallas as pl
from jax.experimental.pallas import tpu as pltpu

_LANE = 128
_MASK_NEG = -10000.0
_VMEM_LIMIT = 64 * 1024 * 1024


def _round_up(x, m):
    return (x + m - 1) // m * m


# --------------------------- pltpu.roll convention probe ---------------------------

_ROLL_NUMPY_CONVENTION = None


def _roll_is_numpy_convention():
    """One-time tiny probe: True if pltpu.roll(x, s, axis) matches np.roll
    (elements move toward higher indices).  Guards the rel-shift rotation sign."""
    global _ROLL_NUMPY_CONVENTION
    if _ROLL_NUMPY_CONVENTION is None:
        def probe_kernel(x_ref, o_ref):
            o_ref[...] = pltpu.roll(x_ref[...], 1, 1)

        x = jnp.tile(jnp.arange(_LANE, dtype=jnp.float32)[None, :], (8, 1))
        y = pl.pallas_call(
            probe_kernel,
            out_shape=jax.ShapeDtypeStruct((8, _LANE), jnp.float32))(x)
        _ROLL_NUMPY_CONVENTION = bool(np.asarray(y)[0, 0] == float(_LANE - 1))
    return _ROLL_NUMPY_CONVENTION


# ------------------------------- linear projections -------------------------------

def _linear_bias_kernel(x_ref, w_ref, b_ref, o_ref):
    acc = jnp.dot(x_ref[...].astype(jnp.bfloat16),
                  w_ref[...].astype(jnp.bfloat16),
                  preferred_element_type=jnp.float32)
    o_ref[...] = (acc + b_ref[...]).astype(o_ref.dtype)


def _linear_nobias_kernel(x_ref, w_ref, o_ref):
    o_ref[...] = jnp.dot(x_ref[...].astype(jnp.bfloat16),
                         w_ref[...].astype(jnp.bfloat16),
                         preferred_element_type=jnp.float32).astype(o_ref.dtype)


def linear_pallas(x, w, b=None, *, block_rows=512):
    """x:(M,K) @ w:(K,N) [+ b] -> (M,N).  bf16 MXU operands, f32 accumulation.
    Rows tiled (<=512) so production M=B*T keeps VMEM / double-buffer headroom."""
    M, K = x.shape
    N = w.shape[1]
    bm = M if M <= block_rows else block_rows
    grid = (pl.cdiv(M, bm),)
    cp = pltpu.CompilerParams(dimension_semantics=("parallel",),
                              vmem_limit_bytes=_VMEM_LIMIT)
    if b is None:
        return pl.pallas_call(
            _linear_nobias_kernel,
            out_shape=jax.ShapeDtypeStruct((M, N), jnp.float32),
            grid_spec=pltpu.PrefetchScalarGridSpec(
                num_scalar_prefetch=0, grid=grid,
                in_specs=[pl.BlockSpec((bm, K), lambda i: (i, 0)),
                          pl.BlockSpec((K, N), lambda i: (0, 0))],
                out_specs=pl.BlockSpec((bm, N), lambda i: (i, 0))),
            compiler_params=cp,
        )(x, w)
    return pl.pallas_call(
        _linear_bias_kernel,
        out_shape=jax.ShapeDtypeStruct((M, N), jnp.float32),
        grid_spec=pltpu.PrefetchScalarGridSpec(
            num_scalar_prefetch=0, grid=grid,
            in_specs=[pl.BlockSpec((bm, K), lambda i: (i, 0)),
                      pl.BlockSpec((K, N), lambda i: (0, 0)),
                      pl.BlockSpec((1, N), lambda i: (0, 0))],
            out_specs=pl.BlockSpec((bm, N), lambda i: (i, 0))),
        compiler_params=cp,
    )(x, w, b.reshape(1, N))


# --------------------- relative-position attention core kernel -----------------------

def _rel_shift_rolls(bd, bit_masks, *, t, roll_numpy):
    """bd: (Tq, W), W a multiple of 128.  Returns (Tq, t) with
    out[i, j] = bd[i, j + lshift_i], lshift_i encoded bitwise in bit_masks.

    log2(t) conditional cyclic lane rotations (pltpu.roll, XLU slot) + per-row
    selects; no VMEM scratch.  Exact: rotations are cyclic over W and the kept
    columns never read past index 2*t-2 <= P-1 < W, so padding never leaks in."""
    w = bd.shape[-1]
    x = bd
    b = 1
    idx = 0
    while b < t:
        shift = (w - b) if roll_numpy else b      # cyclic LEFT rotation by b lanes
        x = jnp.where(bit_masks[idx], pltpu.roll(x, shift, 1), x)
        b *= 2
        idx += 1
    return x[:, :t]


def _relpos_attn_kernel(q_ref, k_ref, v_ref, p_ref, bu_ref, bv_ref, mask_ref,
                        o_ref, *, h, d_k, inv_sqrt_dk, roll_numpy):
    tq = q_ref.shape[1]
    t = k_ref.shape[1]
    q0 = pl.program_id(1) * tq

    q = q_ref[0]                                  # (Tq, D) f32, heads on lanes
    k = k_ref[0].astype(jnp.bfloat16)             # (T, D)
    v = v_ref[0].astype(jnp.bfloat16)             # (T, D)
    p = p_ref[...].astype(jnp.bfloat16)           # (W, D), zero-padded positions

    # fold 1/sqrt(d_k) into the (Tq, D) query tensors instead of scaling H x (T,T)
    qu = ((q + bu_ref[...]) * inv_sqrt_dk).astype(jnp.bfloat16)
    qv = ((q + bv_ref[...]) * inv_sqrt_dk).astype(jnp.bfloat16)

    # additive key-padding bias + post-softmax keep multiplier (no per-head selects)
    mask = mask_ref[0]                            # (1, T) f32 in {0, 1}
    bias = mask * _MASK_NEG                       # (1, T)
    keep = 1.0 - mask                             # (1, T)

    # per-global-query-row left shift for rel_shift, decomposed into bits (hoisted)
    row = lax.broadcasted_iota(jnp.int32, (tq, 1), 0) + q0
    lshift = (t - 1) - row                        # in [0, T-1]
    bit_masks = []
    b = 1
    while b < t:
        bit_masks.append((lshift & b) != 0)
        b *= 2

    # TODO(synk): static unroll over heads (d_k < 128 blocks dynamic lane slicing);
    #             convert to a head grid axis / fori_loop for production H.
    for hd in range(h):
        sl = slice(hd * d_k, (hd + 1) * d_k)
        # matrix_ac = (q+u)/s @ k^T ; matrix_bd = (q+v)/s @ p^T   (bf16 in, f32 acc)
        ac = lax.dot_general(qu[:, sl], k[:, sl], (((1,), (1,)), ((), ())),
                             preferred_element_type=jnp.float32)        # (Tq, T)
        bd = lax.dot_general(qv[:, sl], p[:, sl], (((1,), (1,)), ((), ())),
                             preferred_element_type=jnp.float32)        # (Tq, W)
        bd_s = _rel_shift_rolls(bd, bit_masks, t=t, roll_numpy=roll_numpy)

        scores = ac + bd_s + bias                                        # (Tq, T)
        smax = jnp.max(scores, axis=-1, keepdims=True)
        e = jnp.exp(scores - smax)
        attn = e * pl.reciprocal(jnp.sum(e, axis=-1, keepdims=True), approx=True)
        attn = attn * keep                       # matches masked_fill(attn, 0.0)
        # TODO(synk): attention dropout is identity in eval mode (no RNG applied).

        # head hd occupies lanes [hd*d_k, (hd+1)*d_k) of the lane-dense output block
        o_ref[0, :, sl] = jnp.dot(attn.astype(jnp.bfloat16), v[:, sl],
                                  preferred_element_type=jnp.float32
                                  ).astype(o_ref.dtype)


def relpos_attention_pallas(q, k, v, p_pad, bu, bv, mask_f32, *, h, d_k, block_q=256):
    B, T, D = q.shape
    W = p_pad.shape[0]
    tq = T if T <= block_q else block_q
    assert T % tq == 0, "query block size must divide T"

    kern = functools.partial(
        _relpos_attn_kernel, h=h, d_k=d_k,
        inv_sqrt_dk=1.0 / float(np.sqrt(d_k)),
        roll_numpy=_roll_is_numpy_convention())

    # TODO(synk): for production T add a key-block grid axis (flash-style online
    # softmax) and pl.Buffered(1) on the constant p / bias blocks (v7x VMEM).
    return pl.pallas_call(
        kern,
        out_shape=jax.ShapeDtypeStruct((B, T, D), jnp.float32),
        grid_spec=pltpu.PrefetchScalarGridSpec(
            num_scalar_prefetch=0,
            grid=(B, T // tq),                                   # both parallel
            in_specs=[
                pl.BlockSpec((1, tq, D), lambda b, i: (b, i, 0)),   # q row block
                pl.BlockSpec((1, T, D), lambda b, i: (b, 0, 0)),    # k (all keys)
                pl.BlockSpec((1, T, D), lambda b, i: (b, 0, 0)),    # v
                pl.BlockSpec((W, D), lambda b, i: (0, 0)),          # rel-pos proj (padded)
                pl.BlockSpec((1, D), lambda b, i: (0, 0)),          # pos_bias_u
                pl.BlockSpec((1, D), lambda b, i: (0, 0)),          # pos_bias_v
                pl.BlockSpec((1, 1, T), lambda b, i: (b, 0, 0)),    # key-padding mask
            ],
            out_specs=pl.BlockSpec((1, tq, D), lambda b, i: (b, i, 0)),
        ),
        compiler_params=pltpu.CompilerParams(
            dimension_semantics=("parallel", "parallel"),
            vmem_limit_bytes=_VMEM_LIMIT),
    )(q, k, v, p_pad, bu, bv, mask_f32)


# --------------------------------- full forward ---------------------------------

def custom_attention_forward(params, query, key, value, mask, pos_emb, *, h, d_k):
    # QuantStub/DeQuantStub are identity in float mode.  Heads stay packed on the
    # last (lane) dim throughout; no HBM transposes, no qu/qv duplication.
    B, T, D = query.shape
    n_pos, P, _ = pos_emb.shape
    assert P == 2 * T - 1, "rel_shift requires pos_emb length 2*T-1"
    assert n_pos == 1, "positional embeddings are broadcast over batch"
    assert h * d_k == D
    M = B * T

    if (query is key) and (key is value):
        # self-attention: one wide matmul x @ [Wq|Wk|Wv] (+[bq|bk|bv]); reads x once,
        # lane-dense N=3D output, single launch.
        w_qkv = jnp.concatenate([params['wq'], params['wk'], params['wv']], axis=1)
        b_qkv = jnp.concatenate([params['bq'], params['bk'], params['bv']])
        qkv = linear_pallas(query.reshape(M, D), w_qkv, b_qkv).reshape(B, T, 3 * D)
        q, k, v = qkv[..., :D], qkv[..., D:2 * D], qkv[..., 2 * D:]
    else:
        q = linear_pallas(query.reshape(M, D), params['wq'], params['bq']).reshape(B, T, D)
        k = linear_pallas(key.reshape(M, D), params['wk'], params['bk']).reshape(B, T, D)
        v = linear_pallas(value.reshape(M, D), params['wv'], params['bv']).reshape(B, T, D)

    # positional projection (linear_pos has no bias); pad positions to a lane-dense
    # width W (multiple of 128) so the in-kernel rel-shift rolls stay vreg-native.
    p = linear_pallas(pos_emb.reshape(P, D), params['wpos'])              # (P, D)
    W = max(_LANE, _round_up(P, _LANE))
    p_pad = jnp.pad(p, ((0, W - P), (0, 0)))                              # (W, D)

    bu = params['pos_bias_u'].reshape(1, h * d_k)
    bv = params['pos_bias_v'].reshape(1, h * d_k)
    mask_f32 = mask.astype(jnp.float32)                                   # (B, 1, T)

    ctx = relpos_attention_pallas(q, k, v, p_pad, bu, bv, mask_f32, h=h, d_k=d_k)

    out = linear_pallas(ctx.reshape(M, D), params['wout'], params['bout'])
    return out.reshape(B, T, D)


# ------------------------------ pure-JAX reference ------------------------------

def reference_forward(params, query, key, value, mask, pos_emb, *, h, d_k):
    B, T, D = query.shape
    n_pos, P, _ = pos_emb.shape

    def lin(x, w, b):
        return x @ w + b

    q = lin(query, params['wq'], params['bq']).reshape(B, T, h, d_k)
    k = lin(key, params['wk'], params['bk']).reshape(B, T, h, d_k).transpose(0, 2, 1, 3)
    v = lin(value, params['wv'], params['bv']).reshape(B, T, h, d_k).transpose(0, 2, 1, 3)
    p = (pos_emb @ params['wpos']).reshape(n_pos, P, h, d_k).transpose(0, 2, 1, 3)

    qu = (q + params['pos_bias_u']).transpose(0, 2, 1, 3)
    qv = (q + params['pos_bias_v']).transpose(0, 2, 1, 3)

    ac = jnp.matmul(qu, jnp.swapaxes(k, -1, -2))          # (B,h,T,T)
    bd = jnp.matmul(qv, jnp.swapaxes(p, -1, -2))          # (B,h,T,P)

    # torch-style rel_shift: pad left, view, drop first row, view, then slice
    bpad = jnp.pad(bd, ((0, 0), (0, 0), (0, 0), (1, 0)))
    bd_s = bpad.reshape(B, h, P + 1, T)[:, :, 1:, :].reshape(B, h, T, P)[:, :, :, :T]

    scores = (ac + bd_s) / np.sqrt(d_k)
    m = mask[:, None, :, :]                               # (B,1,1,T)
    scores = jnp.where(m, _MASK_NEG, scores)
    attn = jax.nn.softmax(scores, axis=-1)
    attn = jnp.where(m, 0.0, attn)
    x = jnp.matmul(attn, v).transpose(0, 2, 1, 3).reshape(B, T, h * d_k)
    return x @ params['wout'] + params['bout']


# ------------------------------------ main ------------------------------------

if __name__ == "__main__":
    B, T, D, H = 2, 8, 32, 4
    d_k = D // H
    P = 2 * T - 1

    root = jax.random.PRNGKey(0)
    keys = jax.random.split(root, 16)

    def init(kk, shape, scale=0.1):
        return (scale * jax.random.normal(kk, shape)).astype(jnp.float32)

    params = {
        'wq': init(keys[0], (D, D)), 'bq': init(keys[1], (D,)),
        'wk': init(keys[2], (D, D)), 'bk': init(keys[3], (D,)),
        'wv': init(keys[4], (D, D)), 'bv': init(keys[5], (D,)),
        'wpos': init(keys[6], (D, D)),                      # linear_pos has no bias
        'wout': init(keys[7], (D, D)), 'bout': init(keys[8], (D,)),
        'pos_bias_u': init(keys[9], (H, d_k)),
        'pos_bias_v': init(keys[10], (H, d_k)),
    }

    query = init(keys[11], (B, T, D), 1.0)
    key_t = init(keys[12], (B, T, D), 1.0)
    value = init(keys[13], (B, T, D), 1.0)
    pos_emb = init(keys[14], (1, P, D), 1.0)
    # padding mask: True = masked key position (last 2 keys of batch 1 masked)
    mask = jnp.zeros((B, 1, T), dtype=bool).at[1, 0, T - 2:].set(True)

    # cross-attention-style call (distinct q/k/v): separate projection path
    out = custom_attention_forward(params, query, key_t, value, mask, pos_emb,
                                   h=H, d_k=d_k)
    out = jax.block_until_ready(out)
    ref = reference_forward(params, query, key_t, value, mask, pos_emb, h=H, d_k=d_k)
    np.testing.assert_allclose(np.asarray(out), np.asarray(ref), rtol=2e-2, atol=2e-2)

    # self-attention call (shared tensor): exercises the fused wide-QKV path
    out_sa = custom_attention_forward(params, query, query, query, mask, pos_emb,
                                      h=H, d_k=d_k)
    out_sa = jax.block_until_ready(out_sa)
    ref_sa = reference_forward(params, query, query, query, mask, pos_emb, h=H, d_k=d_k)
    np.testing.assert_allclose(np.asarray(out_sa), np.asarray(ref_sa),
                               rtol=2e-2, atol=2e-2)

    print("KERNEL_OK")
</pallas_src>

<mosaic_0001>
module attributes {stable_mosaic.version = 11 : i64} {
  func.func @_linear_bias_kernel(%arg0: i32, %arg1: memref<16x32xf32, #tpu.memory_space<vmem>>, %arg2: memref<32x32xf32, #tpu.memory_space<vmem>>, %arg3: memref<1x32xf32, #tpu.memory_space<vmem>>, %arg4: memref<16x32xf32, #tpu.memory_space<vmem>>) attributes {dimension_semantics = [#tpu.dimension_semantics<parallel>], iteration_bounds = array<i64: 1>, scalar_prefetch = 0 : i64, scratch_operands = 0 : i64, tpu.core_type = #tpu.core_type<tc>, window_params = [{transform_indices = @transform_0, window_bounds = array<i64: 16, 32>}, {pipeline_mode = #tpu.pipeline_mode<synchronous>, transform_indices = @transform_1, window_bounds = array<i64: 32, 32>}, {pipeline_mode = #tpu.pipeline_mode<synchronous>, transform_indices = @transform_2, window_bounds = array<i64: 1, 32>}, {transform_indices = @transform_3, window_bounds = array<i64: 16, 32>}]} {
    %c0 = arith.constant 0 : index
    %c0_0 = arith.constant 0 : index
    %0 = vector.load %arg1[%c0, %c0_0] : memref<16x32xf32, #tpu.memory_space<vmem>>, vector<16x32xf32>
    %1 = arith.truncf %0 : vector<16x32xf32> to vector<16x32xbf16>
    %c0_1 = arith.constant 0 : index
    %c0_2 = arith.constant 0 : index
    %2 = vector.load %arg2[%c0_1, %c0_2] : memref<32x32xf32, #tpu.memory_space<vmem>>, vector<32x32xf32>
    %3 = arith.truncf %2 : vector<32x32xf32> to vector<32x32xbf16>
    %cst = arith.constant dense<0.000000e+00> : vector<16x32xf32>
    %4 = tpu.matmul %1, %3, %cst {dimension_numbers = #tpu.dot_dimension_numbers<[1], [0], [0], [1], [0, 0, 1, 1], [], []>} : vector<16x32xbf16>, vector<32x32xbf16>, vector<16x32xf32> -> vector<16x32xf32>
    %c0_3 = arith.constant 0 : index
    %c0_4 = arith.constant 0 : index
    %5 = vector.load %arg3[%c0_3, %c0_4] : memref<1x32xf32, #tpu.memory_space<vmem>>, vector<1x32xf32>
    %6 = vector.broadcast %5 : vector<1x32xf32> to vector<16x32xf32>
    %7 = arith.addf %4, %6 : vector<16x32xf32>
    %c0_5 = arith.constant 0 : index
    %c0_6 = arith.constant 0 : index
    %8 = vector.load %arg4[%c0_5, %c0_6] : memref<16x32xf32, #tpu.memory_space<vmem>>, vector<16x32xf32>
    tpu.vector_store %arg4[%c0_5, %c0_6], %7 {strides = array<i32>} : memref<16x32xf32, #tpu.memory_space<vmem>>, vector<16x32xf32>,
    return
  }
  func.func @transform_0(%arg0: i32) -> (i32, i32) {
    %c0_i32 = arith.constant 0 : i32
    %c0_i32_0 = arith.constant 0 : i32
    return %arg0, %c0_i32 : i32, i32
  }
  func.func @transform_1(%arg0: i32) -> (i32, i32) {
    %c0_i32 = arith.constant 0 : i32
    %c0_i32_0 = arith.constant 0 : i32
    %c0_i32_1 = arith.constant 0 : i32
    return %c0_i32, %c0_i32_0 : i32, i32
  }
  func.func @transform_2(%arg0: i32) -> (i32, i32) {
    %c0_i32 = arith.constant 0 : i32
    %c0_i32_0 = arith.constant 0 : i32
    %c0_i32_1 = arith.constant 0 : i32
    return %c0_i32, %c0_i32_0 : i32, i32
  }
  func.func @transform_3(%arg0: i32) -> (i32, i32) {
    %c0_i32 = arith.constant 0 : i32
    %c0_i32_0 = arith.constant 0 : i32
    return %arg0, %c0_i32 : i32, i32
  }
}

</mosaic_0001>

<llo_original>
// kernel: tpu_custom_call.1
$region0: #{tpu_custom_call.1}
  #allocation0 [shape = 'u32[]', space=smem, size = 0x4, offset = 0x4, fixed_abs, tag = 'smem constant byte address 0x4 - core index']
  #allocation1 [shape = 'u32[72,128]{1,0:T(1,128)}', space=vmem, size = 0x9000, scoped, tag = 'internal scratch']
  %s0 = inlined_call_operand.hbm [shape: f32[16,32], index: 0, kind: input, shape index: {}]
  %s1 = inlined_call_operand.hbm [shape: f32[32,32], index: 1, kind: input, shape index: {}]
  %s2 = inlined_call_operand.vmem [shape: f32[1,32], index: 2, kind: input, shape index: {}]
  %s3 = inlined_call_operand.hbm [shape: f32[16,32], index: 3, kind: output, shape index: {}]
  %s4 = sld [smem:[#allocation0]]
  $region30: #{tpu_custom_call.1} parent=0
    _
  %s6 = ssub.s32 1, %s4
  %s7 = scalar_select 0, %s6, %s4
  $region1: #{tpu_custom_call.1} parent=0
    #allocation2 [shape = 'u8[8192]{0}', space=vmem, size = 0x2000, scoped, tag = 'input window, operand 0, single buffered']
    #allocation3 [shape = 's32[1]{0}', space=sflag, size = 0x4, scoped, tag = 'scoped memory for tpu_custom_call.1']
    #allocation4 [shape = 's32[1]{0}', space=sflag, size = 0x4, scoped, tag = 'scoped memory for tpu_custom_call.1']
    #allocation5 [shape = 'u8[16384]{0}', space=vmem, size = 0x4000, scoped, tag = 'input window, operand 1, single buffered']
    #allocation6 [shape = 's32[1]{0}', space=sflag, size = 0x4, scoped, tag = 'scoped memory for tpu_custom_call.1']
    #allocation7 [shape = 'u8[8192]{0}', space=vmem, size = 0x2000, scoped, tag = 'output window, operand 0, single buffered']
    %8 = vsyncpa [#allocation3], 0
    %9 = vsyncpa [#allocation6], 0
    %10 = vsyncpa [#allocation4], 0
    // Predicated region
    $region2: #{tpu_custom_call.1} parent=1 // pred_check
      _
    $region3: #{tpu_custom_call.1} parent=1 // pred_check_branch
      %12 = sbr.rel (0) target = $region5
    $region4: #{tpu_custom_call.1} parent=1 // pred_region
      %14 = vsyncadd [#allocation3], 0
      %s15 = sshll.u32 %s0, 4
      %s16 = int_to_ptr.hbm [resolvable:$true] %s15
      %s17 = sshll.u32 [#allocation2], 4
      %s18 = int_to_ptr.vmem [resolvable:$true] %s17
      %23 = dma.hbm_to_vmem [thread:$0]  %s16, 256, %s18, [#allocation3], 128, 128, 8
    $region5: #{tpu_custom_call.1} parent=1 // pred_fallthru
      _
    // Predicated region
    $region6: #{tpu_custom_call.1} parent=1 // pred_check
      _
    $region7: #{tpu_custom_call.1} parent=1 // pred_check_branch
      %25 = sbr.rel (0) target = $region9
    $region8: #{tpu_custom_call.1} parent=1 // pred_region
      %27 = vsyncadd [#allocation6], 0
      %s28 = sshll.u32 %s1, 4
      %s29 = int_to_ptr.hbm [resolvable:$true] %s28
      %s30 = sshll.u32 [#allocation5], 4
      %s31 = int_to_ptr.vmem [resolvable:$true] %s30
      %36 = dma.hbm_to_vmem [thread:$0]  %s29, 512, %s31, [#allocation6], 128, 128, 8
    $region9: #{tpu_custom_call.1} parent=1 // pred_fallthru
      _
    // Predicated region
    $region10: #{tpu_custom_call.1} parent=1 // pred_check
      _
    $region11: #{tpu_custom_call.1} parent=1 // pred_check_branch
      %38 = sbr.rel (0) target = $region13
    $region12: #{tpu_custom_call.1} parent=1 // pred_region
      _
    $region13: #{tpu_custom_call.1} parent=1 // pred_fallthru
      _
    // Predicated region
    $region14: #{tpu_custom_call.1} parent=1 // pred_check
      _
    $region15: #{tpu_custom_call.1} parent=1 // pred_check_branch
      %40 = sbr.rel (0) target = $region17
    $region16: #{tpu_custom_call.1} parent=1 // pred_region
      %42 = dma.done [#allocation3], 256
    $region17: #{tpu_custom_call.1} parent=1 // pred_fallthru
      _
    // Predicated region
    $region18: #{tpu_custom_call.1} parent=1 // pred_check
      _
    $region19: #{tpu_custom_call.1} parent=1 // pred_check_branch
      %44 = sbr.rel (0) target = $region21
    $region20: #{tpu_custom_call.1} parent=1 // pred_region
      %46 = dma.done [#allocation6], 512
    $region21: #{tpu_custom_call.1} parent=1 // pred_fallthru
      _
    %v48 = vld [vmem:[#allocation2] sm:$0xff]
    %v49 = vld [vmem:[#allocation2 + $0x8] sm:$0xff]
    %v50 = vpack.c.bf16 %v49, %v48
    %v51 = vld [vmem:[#allocation5] sm:$0xff]
    %v52 = vld [vmem:[#allocation5 + $0x8] sm:$0xff]
    %v53 = vld [vmem:[#allocation5 + $0x10] sm:$0xff]
    %v54 = vld [vmem:[#allocation5 + $0x18] sm:$0xff]
    %v55 = vpack.c.bf16 %v52, %v51
    %v56 = vpack.c.bf16 %v54, %v53
    %v57 = vld [vmem:[%s2] sm:$0x1]
    %v59 = vperm.slane %v57, 0
    %vm61 = vcmask 261120
    %v63 = vsel %vm61, %v50, 0
    %65 = vmatpush.bf16.msra.mxu0 0
    %66 = vmatpush.bf16.msra.mxu0 0
    %67 = vmatpush.bf16.msra.mxu0 0
    %68 = vmatpush.bf16.msra.mxu0 0
    %69 = vmatpush.bf16.msra.mxu0 0
    %70 = vmatpush.bf16.msra.mxu0 0
    %71 = vmatpush.bf16.msra.mxu0 %v56
    %72 = vmatpush.bf16.msra.mxu0 %v55
    %73 = vmatmul.bf16.gmra.mxu0 %v63
    %v74 = vpop.f32.mrf.mxu0
    %v75 = vadd.f32 %v59, %v74
    %v76 = vpop.f32.mrf.mxu0
    %v77 = vadd.f32 %v59, %v76
    %78 = vdwg.mxu0
    %79 = vst.msk [vmem:[#allocation7] sm:$0xff] %vm61, %v75
    %80 = vst.msk [vmem:[#allocation7 + $0x8] sm:$0xff] %vm61, %v77
    // Predicated region
    $region22: #{tpu_custom_call.1} parent=1 // pred_check
      _
    $region23: #{tpu_custom_call.1} parent=1 // pred_check_branch
      %82 = sbr.rel (0) target = $region25
    $region24: #{tpu_custom_call.1} parent=1 // pred_region
      %84 = vsyncadd [#allocation4], 0
      %s85 = sshll.u32 [#allocation7], 4
      %s86 = int_to_ptr.vmem [resolvable:$true] %s85
      %s87 = sshll.u32 %s3, 4
      %s88 = int_to_ptr.hbm [resolvable:$true] %s87
      %93 = dma.vmem_to_hbm [thread:$0]  %s86, 256, %s88, [#allocation4], 128, 128, 8
    $region25: #{tpu_custom_call.1} parent=1 // pred_fallthru
      _
    // Predicated region
    $region26: #{tpu_custom_call.1} parent=1 // pred_check
      _
    $region27: #{tpu_custom_call.1} parent=1 // pred_check_branch
      %95 = sbr.rel (0) target = $region29
    $region28: #{tpu_custom_call.1} parent=1 // pred_region
      %97 = dma.done [#allocation4], 256
    $region29: #{tpu_custom_call.1} parent=1 // pred_fallthru
      _
    %98 = vsyncpa [#allocation3], 1
    %99 = vsyncpa [#allocation6], 1
    %100 = vsyncpa [#allocation4], 1

</llo_original>
